<compile_context>
chip_gen: v7x
topology: tpu7x:2x2x1
jax: 0.10.0
libtpu: 0.0.40
codegen_flags: <defaults>
</compile_context>

<pallas_src>
import jax
import jax.numpy as jnp
import numpy as np
from jax import lax
from jax.experimental import pallas as pl
from jax.experimental.pallas import tpu as pltpu

# Hyperparameters from the PyTorch script
N = 2                      # batch
K = 4                      # seq_len (K1)
EMB = 4                    # emb_dim (M)
HEADS = 2                  # num_heads
HEAD_DIM = EMB // HEADS    # dim_q = dim_v per head
EPS = 1e-10                # LayerNormalization epsilon (Python float -> literal)

# Packed-slab layout: N "x" planes followed by 3 weight planes.
PLANE_ROWS = max(K, EMB, 3)
PLANE_COLS = 3 * EMB


def decoder_block_kernel(slab_ref, o_ref):
    slab = slab_ref[...]                            # one (N+3, PLANE_ROWS, PLANE_COLS) load
    x = slab[:N, :K, :EMB]                          # (N, K, EMB)
    wqkv = slab[N, :EMB, :]                         # (EMB, 3*EMB) = [Wq | Wk | Wv]
    wo = slab[N + 1, :EMB, :EMB]                    # (EMB, EMB)
    bo = slab[N + 2:N + 3, 0:1, :EMB]               # (1, 1, EMB)
    gamma = slab[N + 2:N + 3, 1:2, :EMB]            # (1, 1, EMB)
    beta = slab[N + 2:N + 3, 2:3, :EMB]             # (1, 1, EMB)

    scale = 1.0 / (HEAD_DIM ** 0.5)                 # torch scales by projected dim_q

    # Hoisted broadcasts (done exactly once; not inside the head loop).
    wqkv_b = jnp.broadcast_to(wqkv, (N, EMB, 3 * EMB))
    wo_b = jnp.broadcast_to(wo, (N, EMB, EMB))

    # Fused QKV projection for all batch rows and heads (batched MXU matmul).
    proj = jnp.einsum('nke,nef->nkf', x, wqkv_b,
                      preferred_element_type=jnp.float32)           # (N, K, 3*EMB)

    attn = None
    for h in range(HEADS):                          # HEADS == 2: tiny static unroll
        qh = proj[:, :, h * HEAD_DIM:(h + 1) * HEAD_DIM]            # (N, K, HD)
        kh = proj[:, :, EMB + h * HEAD_DIM:EMB + (h + 1) * HEAD_DIM]
        vh = proj[:, :, 2 * EMB + h * HEAD_DIM:2 * EMB + (h + 1) * HEAD_DIM]

        s = jnp.einsum('nqd,nkd->nqk', qh, kh,
                       preferred_element_type=jnp.float32) * scale  # (N, K, K)
        s_max = jnp.max(s, axis=-1, keepdims=True)
        e = jnp.exp(s - s_max)
        denom = jnp.sum(e, axis=-1, keepdims=True)
        # approx=False is an exact divide (keeps the 1e-5 check tight); flip to
        # approx=True (cheap EUP vrcp) once the accuracy tolerance allows.
        w = e * pl.reciprocal(denom, approx=False)
        yh = jnp.einsum('nqk,nkd->nqd', w, vh,
                        preferred_element_type=jnp.float32)         # (N, K, HD)

        # concat-over-heads + linear_attn  ==  sum_h  yh @ Wo[h*HD:(h+1)*HD, :]
        contrib = jnp.einsum('nqd,nde->nqe', yh,
                             wo_b[:, h * HEAD_DIM:(h + 1) * HEAD_DIM, :],
                             preferred_element_type=jnp.float32)    # (N, K, EMB)
        attn = contrib if attn is None else attn + contrib
    attn = attn + bo

    # Residual + LayerNorm (unbiased=False variance; torch adds eps to std --
    # rsqrt(var + eps^2) differs from 1/(std + eps) by ~1e-9 relative here).
    z = x + attn
    mean = jnp.mean(z, axis=-1, keepdims=True)
    var = jnp.mean((z - mean) ** 2, axis=-1, keepdims=True)
    y = gamma * (z - mean) * lax.rsqrt(var + EPS * EPS) + beta

    # TODO(synk): nn.Dropout(p=0.2) is identity at inference; not applied here.
    # TODO(synk): get_subsequent_mask is computed by the torch forward but never
    #             passed to attention (mask=None), so it is intentionally omitted.
    o_ref[...] = y                                   # single full-block store


def _plane(a):
    """Pad a 2-D array to one (PLANE_ROWS, PLANE_COLS) slab plane."""
    return jnp.pad(a, ((0, PLANE_ROWS - a.shape[0]), (0, PLANE_COLS - a.shape[1])))


def pack_weights(wq, wk, wv, wo, bo, gamma, beta):
    """Pack the 8 tiny parameter tensors into one (3, PLANE_ROWS, PLANE_COLS) slab."""
    heads_lanes = lambda w: jnp.concatenate([w[h] for h in range(HEADS)], axis=-1)  # (EMB, EMB)
    w_qkv = jnp.concatenate([heads_lanes(wq), heads_lanes(wk), heads_lanes(wv)],
                            axis=-1)                                 # (EMB, 3*EMB)
    vecs = jnp.concatenate([bo, gamma, beta], axis=0)                # (3, EMB)
    return jnp.stack([_plane(w_qkv), _plane(wo), _plane(vecs)], axis=0)


def decoder_block(dec_inp, w_planes):
    """dec_inp: (N, K, EMB); w_planes from pack_weights(). Returns (N, K, EMB)."""
    x_planes = jnp.pad(dec_inp, ((0, 0), (0, PLANE_ROWS - K), (0, PLANE_COLS - EMB)))
    slab = jnp.concatenate([x_planes, w_planes], axis=0)   # (N+3, PLANE_ROWS, PLANE_COLS)
    return pl.pallas_call(
        decoder_block_kernel,
        out_shape=jax.ShapeDtypeStruct((N, K, EMB), jnp.float32),
        in_specs=[pl.BlockSpec(memory_space=pltpu.MemorySpace.VMEM)],
        out_specs=pl.BlockSpec(memory_space=pltpu.MemorySpace.VMEM),
    )(slab)


def decoder_block_reference(x, wq, wk, wv, wo, bo, gamma, beta):
    """Pure-JAX reference matching the PyTorch forward."""
    heads = []
    for h in range(HEADS):
        q = x @ wq[h]
        k = x @ wk[h]
        v = x @ wv[h]
        s = jnp.einsum('nqe,nke->nqk', q, k) / (HEAD_DIM ** 0.5)
        w = jax.nn.softmax(s, axis=-1)
        heads.append(jnp.einsum('nqk,nke->nqe', w, v))
    cat = jnp.concatenate(heads, axis=-1)
    attn = cat @ wo + bo.reshape(EMB)
    z = x + attn
    mean = z.mean(axis=-1, keepdims=True)
    std = jnp.sqrt(((z - mean) ** 2).mean(axis=-1, keepdims=True))
    return gamma.reshape(EMB) * (z - mean) / (std + EPS) + beta.reshape(EMB)


if __name__ == "__main__":
    key = jax.random.PRNGKey(0)
    k_q, k_k, k_v, k_o, k_enc = jax.random.split(key, 5)

    # Deterministic parameters (same init *distributions* as the torch module).
    c_qkv = (6.0 / (EMB + HEAD_DIM)) ** 0.5
    wq = jax.random.uniform(k_q, (HEADS, EMB, HEAD_DIM),
                            minval=-c_qkv, maxval=c_qkv, dtype=jnp.float32)
    wk = jax.random.uniform(k_k, (HEADS, EMB, HEAD_DIM),
                            minval=-c_qkv, maxval=c_qkv, dtype=jnp.float32)
    wv = jax.random.uniform(k_v, (HEADS, EMB, HEAD_DIM),
                            minval=-c_qkv, maxval=c_qkv, dtype=jnp.float32)
    c_o = (6.0 / (HEADS * HEAD_DIM + EMB)) ** 0.5
    wo = jax.random.uniform(k_o, (HEADS * HEAD_DIM, EMB),
                            minval=-c_o, maxval=c_o, dtype=jnp.float32)
    bo = jnp.zeros((1, EMB), jnp.float32)       # nn.init.zeros_ on biases
    gamma = jnp.ones((1, EMB), jnp.float32)
    beta = jnp.zeros((1, EMB), jnp.float32)

    # Inputs: dec_inp matches the torch script's linspace; enc_inp is unused
    # by the forward (kept only for signature fidelity).
    dec_inp = jnp.linspace(-0.4, 0.6, N * K * EMB,
                           dtype=jnp.float32).reshape(N, K, EMB)
    enc_inp = jax.random.normal(k_enc, (N, K, EMB), dtype=jnp.float32)  # unused

    w_planes = pack_weights(wq, wk, wv, wo, bo, gamma, beta)

    out = decoder_block(dec_inp, w_planes)
    out = jax.block_until_ready(out)

    ref = decoder_block_reference(dec_inp, wq, wk, wv, wo, bo, gamma, beta)
    np.testing.assert_allclose(np.asarray(out), np.asarray(ref),
                               rtol=1e-5, atol=1e-5)
    print("KERNEL_OK")
</pallas_src>

<mosaic_0001>
module attributes {stable_mosaic.version = 11 : i64} {
  func.func @decoder_block_kernel(%arg0: memref<5x4x12xf32, #tpu.memory_space<vmem>>, %arg1: memref<2x4x4xf32, #tpu.memory_space<vmem>>) attributes {dimension_semantics = [], scalar_prefetch = 0 : i64, scratch_operands = 0 : i64, tpu.core_type = #tpu.core_type<tc>} {
    %c0 = arith.constant 0 : index
    %c0_0 = arith.constant 0 : index
    %c0_1 = arith.constant 0 : index
    %0 = vector.load %arg0[%c0, %c0_0, %c0_1] : memref<5x4x12xf32, #tpu.memory_space<vmem>>, vector<5x4x12xf32>
    %1 = vector.extract_strided_slice %0 {offsets = [0, 0, 0], sizes = [2, 4, 4], strides = [1, 1, 1]} : vector<5x4x12xf32> to vector<2x4x4xf32>
    %2 = vector.extract_strided_slice %0 {offsets = [2, 0, 0], sizes = [1, 4, 12], strides = [1, 1, 1]} : vector<5x4x12xf32> to vector<1x4x12xf32>
    %3 = vector.shape_cast %2 : vector<1x4x12xf32> to vector<4x12xf32>
    %4 = vector.extract_strided_slice %0 {offsets = [3, 0, 0], sizes = [1, 4, 4], strides = [1, 1, 1]} : vector<5x4x12xf32> to vector<1x4x4xf32>
    %5 = vector.shape_cast %4 : vector<1x4x4xf32> to vector<4x4xf32>
    %6 = vector.extract_strided_slice %0 {offsets = [4, 0, 0], sizes = [1, 1, 4], strides = [1, 1, 1]} : vector<5x4x12xf32> to vector<1x1x4xf32>
    %7 = vector.extract_strided_slice %0 {offsets = [4, 1, 0], sizes = [1, 1, 4], strides = [1, 1, 1]} : vector<5x4x12xf32> to vector<1x1x4xf32>
    %8 = vector.extract_strided_slice %0 {offsets = [4, 2, 0], sizes = [1, 1, 4], strides = [1, 1, 1]} : vector<5x4x12xf32> to vector<1x1x4xf32>
    %9 = vector.shape_cast %3 : vector<4x12xf32> to vector<1x4x12xf32>
    %10 = vector.broadcast %9 : vector<1x4x12xf32> to vector<2x4x12xf32>
    %11 = vector.shape_cast %5 : vector<4x4xf32> to vector<1x4x4xf32>
    %12 = vector.broadcast %11 : vector<1x4x4xf32> to vector<2x4x4xf32>
    "tpu.trace_start"() <{level = 10 : i32, message = "nke,nef->nkf"}> : () -> ()
    %cst = arith.constant dense<0.000000e+00> : vector<2x4x12xf32>
    %13 = tpu.matmul %1, %10, %cst {dimension_numbers = #tpu.dot_dimension_numbers<[2], [1], [1], [2], [0, 0, 0, 1, 1, 2], [0], [0]>} : vector<2x4x4xf32>, vector<2x4x12xf32>, vector<2x4x12xf32> -> vector<2x4x12xf32>
    "tpu.trace_stop"() : () -> ()
    %14 = vector.extract_strided_slice %13 {offsets = [0, 0, 0], sizes = [2, 4, 2], strides = [1, 1, 1]} : vector<2x4x12xf32> to vector<2x4x2xf32>
    %15 = vector.extract_strided_slice %13 {offsets = [0, 0, 4], sizes = [2, 4, 2], strides = [1, 1, 1]} : vector<2x4x12xf32> to vector<2x4x2xf32>
    %16 = vector.extract_strided_slice %13 {offsets = [0, 0, 8], sizes = [2, 4, 2], strides = [1, 1, 1]} : vector<2x4x12xf32> to vector<2x4x2xf32>
    "tpu.trace_start"() <{level = 10 : i32, message = "nqd,nkd->nqk"}> : () -> ()
    %cst_2 = arith.constant dense<0.000000e+00> : vector<2x4x4xf32>
    %17 = tpu.matmul %14, %15, %cst_2 {dimension_numbers = #tpu.dot_dimension_numbers<[2], [2], [1], [1], [0, 0, 0, 1, 1, 1], [0], [0]>} : vector<2x4x2xf32>, vector<2x4x2xf32>, vector<2x4x4xf32> -> vector<2x4x4xf32>
    "tpu.trace_stop"() : () -> ()
    %cst_3 = arith.constant 0.707106769 : f32
    %18 = vector.broadcast %cst_3 : f32 to vector<2x4x4xf32>
    %19 = arith.mulf %17, %18 : vector<2x4x4xf32>
    %cst_4 = arith.constant dense<0xFF800000> : vector<2x4xf32>
    %20 = vector.multi_reduction <maximumf>, %19, %cst_4 [2] : vector<2x4x4xf32> to vector<2x4xf32>
    %21 = vector.shape_cast %20 : vector<2x4xf32> to vector<2x4x1xf32>
    %22 = vector.broadcast %21 : vector<2x4x1xf32> to vector<2x4x4xf32>
    %23 = arith.subf %19, %22 : vector<2x4x4xf32>
    %24 = math.exp %23 : vector<2x4x4xf32>
    %cst_5 = arith.constant dense<0.000000e+00> : vector<2x4xf32>
    %25 = vector.multi_reduction <add>, %24, %cst_5 [2] : vector<2x4x4xf32> to vector<2x4xf32>
    %26 = vector.shape_cast %25 : vector<2x4xf32> to vector<2x4x1xf32>
    %27 = tpu.reciprocal %26 : vector<2x4x1xf32> -> vector<2x4x1xf32>
    %28 = vector.broadcast %27 : vector<2x4x1xf32> to vector<2x4x4xf32>
    %29 = arith.mulf %24, %28 : vector<2x4x4xf32>
    "tpu.trace_start"() <{level = 10 : i32, message = "nqk,nkd->nqd"}> : () -> ()
    %cst_6 = arith.constant dense<0.000000e+00> : vector<2x4x2xf32>
    %30 = tpu.matmul %29, %16, %cst_6 {dimension_numbers = #tpu.dot_dimension_numbers<[2], [1], [1], [2], [0, 0, 0, 1, 1, 2], [0], [0]>} : vector<2x4x4xf32>, vector<2x4x2xf32>, vector<2x4x2xf32> -> vector<2x4x2xf32>
    "tpu.trace_stop"() : () -> ()
    %31 = vector.extract_strided_slice %12 {offsets = [0, 0, 0], sizes = [2, 2, 4], strides = [1, 1, 1]} : vector<2x4x4xf32> to vector<2x2x4xf32>
    "tpu.trace_start"() <{level = 10 : i32, message = "nqd,nde->nqe"}> : () -> ()
    %cst_7 = arith.constant dense<0.000000e+00> : vector<2x4x4xf32>
    %32 = tpu.matmul %30, %31, %cst_7 {dimension_numbers = #tpu.dot_dimension_numbers<[2], [1], [1], [2], [0, 0, 0, 1, 1, 2], [0], [0]>} : vector<2x4x2xf32>, vector<2x2x4xf32>, vector<2x4x4xf32> -> vector<2x4x4xf32>
    "tpu.trace_stop"() : () -> ()
    %33 = vector.extract_strided_slice %13 {offsets = [0, 0, 2], sizes = [2, 4, 2], strides = [1, 1, 1]} : vector<2x4x12xf32> to vector<2x4x2xf32>
    %34 = vector.extract_strided_slice %13 {offsets = [0, 0, 6], sizes = [2, 4, 2], strides = [1, 1, 1]} : vector<2x4x12xf32> to vector<2x4x2xf32>
    %35 = vector.extract_strided_slice %13 {offsets = [0, 0, 10], sizes = [2, 4, 2], strides = [1, 1, 1]} : vector<2x4x12xf32> to vector<2x4x2xf32>
    "tpu.trace_start"() <{level = 10 : i32, message = "nqd,nkd->nqk"}> : () -> ()
    %cst_8 = arith.constant dense<0.000000e+00> : vector<2x4x4xf32>
    %36 = tpu.matmul %33, %34, %cst_8 {dimension_numbers = #tpu.dot_dimension_numbers<[2], [2], [1], [1], [0, 0, 0, 1, 1, 1], [0], [0]>} : vector<2x4x2xf32>, vector<2x4x2xf32>, vector<2x4x4xf32> -> vector<2x4x4xf32>
    "tpu.trace_stop"() : () -> ()
    %cst_9 = arith.constant 0.707106769 : f32
    %37 = vector.broadcast %cst_9 : f32 to vector<2x4x4xf32>
    %38 = arith.mulf %36, %37 : vector<2x4x4xf32>
    %cst_10 = arith.constant dense<0xFF800000> : vector<2x4xf32>
    %39 = vector.multi_reduction <maximumf>, %38, %cst_10 [2] : vector<2x4x4xf32> to vector<2x4xf32>
    %40 = vector.shape_cast %39 : vector<2x4xf32> to vector<2x4x1xf32>
    %41 = vector.broadcast %40 : vector<2x4x1xf32> to vector<2x4x4xf32>
    %42 = arith.subf %38, %41 : vector<2x4x4xf32>
    %43 = math.exp %42 : vector<2x4x4xf32>
    %cst_11 = arith.constant dense<0.000000e+00> : vector<2x4xf32>
    %44 = vector.multi_reduction <add>, %43, %cst_11 [2] : vector<2x4x4xf32> to vector<2x4xf32>
    %45 = vector.shape_cast %44 : vector<2x4xf32> to vector<2x4x1xf32>
    %46 = tpu.reciprocal %45 : vector<2x4x1xf32> -> vector<2x4x1xf32>
    %47 = vector.broadcast %46 : vector<2x4x1xf32> to vector<2x4x4xf32>
    %48 = arith.mulf %43, %47 : vector<2x4x4xf32>
    "tpu.trace_start"() <{level = 10 : i32, message = "nqk,nkd->nqd"}> : () -> ()
    %cst_12 = arith.constant dense<0.000000e+00> : vector<2x4x2xf32>
    %49 = tpu.matmul %48, %35, %cst_12 {dimension_numbers = #tpu.dot_dimension_numbers<[2], [1], [1], [2], [0, 0, 0, 1, 1, 2], [0], [0]>} : vector<2x4x4xf32>, vector<2x4x2xf32>, vector<2x4x2xf32> -> vector<2x4x2xf32>
    "tpu.trace_stop"() : () -> ()
    %50 = vector.extract_strided_slice %12 {offsets = [0, 2, 0], sizes = [2, 2, 4], strides = [1, 1, 1]} : vector<2x4x4xf32> to vector<2x2x4xf32>
    "tpu.trace_start"() <{level = 10 : i32, message = "nqd,nde->nqe"}> : () -> ()
    %cst_13 = arith.constant dense<0.000000e+00> : vector<2x4x4xf32>
    %51 = tpu.matmul %49, %50, %cst_13 {dimension_numbers = #tpu.dot_dimension_numbers<[2], [1], [1], [2], [0, 0, 0, 1, 1, 2], [0], [0]>} : vector<2x4x2xf32>, vector<2x2x4xf32>, vector<2x4x4xf32> -> vector<2x4x4xf32>
    "tpu.trace_stop"() : () -> ()
    %52 = arith.addf %32, %51 : vector<2x4x4xf32>
    %53 = vector.broadcast %6 : vector<1x1x4xf32> to vector<2x4x4xf32>
    %54 = arith.addf %52, %53 : vector<2x4x4xf32>
    %55 = arith.addf %1, %54 : vector<2x4x4xf32>
    %cst_14 = arith.constant dense<0.000000e+00> : vector<2x4xf32>
    %56 = vector.multi_reduction <add>, %55, %cst_14 [2] : vector<2x4x4xf32> to vector<2x4xf32>
    %57 = vector.shape_cast %56 : vector<2x4xf32> to vector<2x4x1xf32>
    %cst_15 = arith.constant 4.000000e+00 : f32
    %58 = vector.broadcast %cst_15 : f32 to vector<2x4x1xf32>
    %59 = arith.divf %57, %58 : vector<2x4x1xf32>
    %60 = vector.broadcast %59 : vector<2x4x1xf32> to vector<2x4x4xf32>
    %61 = arith.subf %55, %60 : vector<2x4x4xf32>
    %62 = arith.mulf %61, %61 : vector<2x4x4xf32>
    %cst_16 = arith.constant dense<0.000000e+00> : vector<2x4xf32>
    %63 = vector.multi_reduction <add>, %62, %cst_16 [2] : vector<2x4x4xf32> to vector<2x4xf32>
    %64 = vector.shape_cast %63 : vector<2x4xf32> to vector<2x4x1xf32>
    %cst_17 = arith.constant 4.000000e+00 : f32
    %65 = vector.broadcast %cst_17 : f32 to vector<2x4x1xf32>
    %66 = arith.divf %64, %65 : vector<2x4x1xf32>
    %67 = vector.broadcast %59 : vector<2x4x1xf32> to vector<2x4x4xf32>
    %68 = arith.subf %55, %67 : vector<2x4x4xf32>
    %69 = vector.broadcast %7 : vector<1x1x4xf32> to vector<2x4x4xf32>
    %70 = arith.mulf %69, %68 : vector<2x4x4xf32>
    %cst_18 = arith.constant 9.99999968E-21 : f32
    %71 = vector.broadcast %cst_18 : f32 to vector<2x4x1xf32>
    %72 = arith.addf %66, %71 : vector<2x4x1xf32>
    %73 = math.rsqrt %72 : vector<2x4x1xf32>
    %74 = vector.broadcast %73 : vector<2x4x1xf32> to vector<2x4x4xf32>
    %75 = arith.mulf %70, %74 : vector<2x4x4xf32>
    %76 = vector.broadcast %8 : vector<1x1x4xf32> to vector<2x4x4xf32>
    %77 = arith.addf %75, %76 : vector<2x4x4xf32>
    %c0_19 = arith.constant 0 : index
    %c0_20 = arith.constant 0 : index
    %c0_21 = arith.constant 0 : index
    %78 = vector.load %arg1[%c0_19, %c0_20, %c0_21] : memref<2x4x4xf32, #tpu.memory_space<vmem>>, vector<2x4x4xf32>
    tpu.vector_store %arg1[%c0_19, %c0_20, %c0_21], %77 {strides = array<i32>} : memref<2x4x4xf32, #tpu.memory_space<vmem>>, vector<2x4x4xf32>,
    return
  }
}

</mosaic_0001>

<llo_original>
// kernel: tpu_custom_call.1
$region0: #{tpu_custom_call.1}
  #allocation0 [shape = 'u32[]', space=smem, size = 0x4, offset = 0x4, fixed_abs, tag = 'smem constant byte address 0x4 - core index']
  #allocation1 [shape = 'u32[144,128]{1,0:T(1,128)}', space=vmem, size = 0x12000, scoped, tag = 'internal scratch']
  %s0 = inlined_call_operand.hbm [shape: f32[5,4,12], index: 0, kind: input, shape index: {}]
  %s1 = inlined_call_operand.hbm [shape: f32[2,4,4], index: 1, kind: output, shape index: {}]
  %s2 = sld [smem:[#allocation0]]
  $region18: #{tpu_custom_call.1} parent=0
    _
  %s4 = ssub.s32 1, %s2
  %s5 = scalar_select 0, %s4, %s2
  $region1: #{tpu_custom_call.1} parent=0
    #allocation2 [shape = 'u8[10240]{0}', space=vmem, size = 0x2800, scoped, tag = 'input window, operand 0, single buffered']
    #allocation3 [shape = 's32[1]{0}', space=sflag, size = 0x4, scoped, tag = 'scoped memory for tpu_custom_call.1']
    #allocation4 [shape = 's32[1]{0}', space=sflag, size = 0x4, scoped, tag = 'scoped memory for tpu_custom_call.1']
    #allocation5 [shape = 'u8[4096]{0}', space=vmem, size = 0x1000, scoped, tag = 'output window, operand 0, single buffered']
    %6 = vsyncpa [#allocation3], 0
    %7 = vsyncpa [#allocation4], 0
    // Predicated region
    $region2: #{tpu_custom_call.1} parent=1 // pred_check
      _
    $region3: #{tpu_custom_call.1} parent=1 // pred_check_branch
      %9 = sbr.rel (0) target = $region5
    $region4: #{tpu_custom_call.1} parent=1 // pred_region
      %s11 = ssub.s32 320, 320
      %12 = vsyncadd [#allocation3], %s11
      %s13 = sshll.u32 [#allocation2], 4
      %s14 = int_to_ptr.vmem [resolvable:$true] %s13
      %19 = dma.hbm_to_vmem [thread:$0]  %s0, 320, %s14, [#allocation3], 64, 64, 4
    $region5: #{tpu_custom_call.1} parent=1 // pred_fallthru
      _
    // Predicated region
    $region6: #{tpu_custom_call.1} parent=1 // pred_check
      _
    $region7: #{tpu_custom_call.1} parent=1 // pred_check_branch
      %21 = sbr.rel (0) target = $region9
    $region8: #{tpu_custom_call.1} parent=1 // pred_region
      %22 = dma.done [#allocation3], 320
    $region9: #{tpu_custom_call.1} parent=1 // pred_fallthru
      _
    %v23 = vld [vmem:[#allocation2] sm:$0xf]
    %v24 = vld [vmem:[#allocation2 + $0x4] sm:$0xf]
    %v25 = vld [vmem:[#allocation2 + $0x8] sm:$0xf]
    %v26 = vld [vmem:[#allocation2 + $0xc] sm:$0xf]
    %v27 = vld [vmem:[#allocation2 + $0x10] sm:$0xf]
    %vm28 = vcmask 31744
    %v30 = vsel %vm28, %v23, 0
    %vm32 = vcmask 1043456
    %v34 = vsel %vm32, %v25, 0
    %36 = vmatprep.subr.mxu0 0.0
    %37 = vmatpush1.msra.mxu0 %v34
    %38 = vmatprep.subr.mxu0 0.0
    %39 = vmatpush1.msra.mxu0 0.0
    %40 = vmatprep.subr.mxu0 0.0
    %41 = vmatpush1.msra.mxu0 0.0
    %42 = vmatprep.subr.mxu0 0.0
    %43 = vmatpush1.msra.mxu0 0.0
    %44 = vmatprep.subr.mxu0 0.0
    %45 = vmatpush1.msra.mxu0 0.0
    %46 = vmatprep.subr.mxu0 0.0
    %47 = vmatpush1.msra.mxu0 0.0
    %48 = vmatprep.subr.mxu0 0.0
    %49 = vmatpush1.msra.mxu0 0.0
    %50 = vmatprep.subr.mxu0 0.0
    %51 = vmatpush1.msra.mxu0 0.0
    %52 = vmatprep.subr.mxu0 0.0
    %53 = vmatpush1.msra.mxu0 0.0
    %54 = vmatprep.subr.mxu0 0.0
    %55 = vmatpush1.msra.mxu0 0.0
    %56 = vmatprep.subr.mxu0 0.0
    %57 = vmatpush1.msra.mxu0 0.0
    %58 = vmatprep.subr.mxu0 0.0
    %59 = vmatpush1.msra.mxu0 0.0
    %60 = vmatprep.subr.mxu0 0.0
    %61 = vmatpush1.msra.mxu0 0.0
    %62 = vmatprep.subr.mxu0 0.0
    %63 = vmatpush1.msra.mxu0 0.0
    %64 = vmatprep.subr.mxu0 0.0
    %65 = vmatpush1.msra.mxu0 0.0
    %66 = vmatprep.subr.mxu0 0.0
    %67 = vmatpush1.msra.mxu0 0.0
    %68 = vmatprep.subr.mxu0 0.0
    %69 = vmatpush1.msra.mxu0 0.0
    %70 = vmatprep.subr.mxu0 0.0
    %71 = vmatpush1.msra.mxu0 0.0
    %72 = vmatprep.subr.mxu0 0.0
    %73 = vmatpush1.msra.mxu0 0.0
    %74 = vmatprep.subr.mxu0 0.0
    %75 = vmatpush1.msra.mxu0 0.0
    %76 = vmatprep.subr.mxu0 0.0
    %77 = vmatpush1.msra.mxu0 0.0
    %78 = vmatprep.subr.mxu0 0.0
    %79 = vmatpush1.msra.mxu0 0.0
    %80 = vmatprep.subr.mxu0 0.0
    %81 = vmatpush1.msra.mxu0 0.0
    %82 = vmatprep.subr.mxu0 0.0
    %83 = vmatpush1.msra.mxu0 0.0
    %84 = vmatprep.subr.mxu0 0.0
    %85 = vmatpush1.msra.mxu0 0.0
    %86 = vmatprep.subr.mxu0 0.0
    %87 = vmatpush1.msra.mxu0 0.0
    %88 = vmatprep.subr.mxu0 0.0
    %89 = vmatpush1.msra.mxu0 0.0
    %90 = vmatprep.subr.mxu0 0.0
    %91 = vmatpush1.msra.mxu0 0.0
    %92 = vmatprep.subr.mxu0 0.0
    %93 = vmatpush1.msra.mxu0 0.0
    %94 = vmatprep.subr.mxu0 0.0
    %95 = vmatpush1.msra.mxu0 0.0
    %96 = vmatprep.subr.mxu0 0.0
    %97 = vmatpush1.msra.mxu0 0.0
    %98 = vmatprep.subr.mxu0 0.0
    %99 = vmatpush1.msra.mxu0 0.0
    %100 = vmatprep.mubr.f32.mxu0 0.0
    %101 = vmatmul.mubr.f32.gmra.mrb[0].mxu0 %v30
    %v102 = vpop.f32.mrb[0].mxu0
    %v103 = vadd.f32 0.0, %v102
    %v104 = vpop.f32.mrb[0].mxu0
    %105 = vdwg.mxu0
    %v107 = vsel %vm28, %v24, 0
    %109 = vmatprep.subr.mxu0 0.0
    %110 = vmatpush1.msra.mxu0 %v34
    %111 = vmatprep.subr.mxu0 0.0
    %112 = vmatpush1.msra.mxu0 0.0
    %113 = vmatprep.subr.mxu0 0.0
    %114 = vmatpush1.msra.mxu0 0.0
    %115 = vmatprep.subr.mxu0 0.0
    %116 = vmatpush1.msra.mxu0 0.0
    %117 = vmatprep.subr.mxu0 0.0
    %118 = vmatpush1.msra.mxu0 0.0
    %119 = vmatprep.subr.mxu0 0.0
    %120 = vmatpush1.msra.mxu0 0.0
    %121 = vmatprep.subr.mxu0 0.0
    %122 = vmatpush1.msra.mxu0 0.0
    %123 = vmatprep.subr.mxu0 0.0
    %124 = vmatpush1.msra.mxu0 0.0
    %125 = vmatprep.subr.mxu0 0.0
    %126 = vmatpush1.msra.mxu0 0.0
    %127 = vmatprep.subr.mxu0 0.0
    %128 = vmatpush1.msra.mxu0 0.0
    %129 = vmatprep.subr.mxu0 0.0
    %130 = vmatpush1.msra.mxu0 0.0
    %131 = vmatprep.subr.mxu0 0.0
    %132 = vmatpush1.msra.mxu0 0.0
    %133 = vmatprep.subr.mxu0 0.0
    %134 = vmatpush1.msra.mxu0 0.0
    %135 = vmatprep.subr.mxu0 0.0
    %136 = vmatpush1.msra.mxu0 0.0
    %137 = vmatprep.subr.mxu0 0.0
    %138 = vmatpush1.msra.mxu0 0.0
    %139 = vmatprep.subr.mxu0 0.0
    %140 = vmatpush1.msra.mxu0 0.0
    %141 = vmatprep.subr.mxu0 0.0
    %142 = vmatpush1.msra.mxu0 0.0
    %143 = vmatprep.subr.mxu0 0.0
    %144 = vmatpush1.msra.mxu0 0.0
    %145 = vmatprep.subr.mxu0 0.0
    %146 = vmatpush1.msra.mxu0 0.0
    %147 = vmatprep.subr.mxu0 0.0
    %148 = vmatpush1.msra.mxu0 0.0
    %149 = vmatprep.subr.mxu0 0.0
    %150 = vmatpush1.msra.mxu0 0.0
    %151 = vmatprep.subr.mxu0 0.0
    %152 = vmatpush1.msra.mxu0 0.0
    %153 = vmatprep.subr.mxu0 0.0
    %154 = vmatpush1.msra.mxu0 0.0
    %155 = vmatprep.subr.mxu0 0.0
    %156 = vmatpush1.msra.mxu0 0.0
    %157 = vmatprep.subr.mxu0 0.0
    %158 = vmatpush1.msra.mxu0 0.0
    %159 = vmatprep.subr.mxu0 0.0
    %160 = vmatpush1.msra.mxu0 0.0
    %161 = vmatprep.subr.mxu0 0.0
    %162 = vmatpush1.msra.mxu0 0.0
    %163 = vmatprep.subr.mxu0 0.0
    %164 = vmatpush1.msra.mxu0 0.0
    %165 = vmatprep.subr.mxu0 0.0
    %166 = vmatpush1.msra.mxu0 0.0
    %167 = vmatprep.subr.mxu0 0.0
    %168 = vmatpush1.msra.mxu0 0.0
    %169 = vmatprep.subr.mxu0 0.0
    %170 = vmatpush1.msra.mxu0 0.0
    %171 = vmatprep.subr.mxu0 0.0
    %172 = vmatpush1.msra.mxu0 0.0
    %173 = vmatprep.mubr.f32.mxu0 0.0
    %174 = vmatmul.mubr.f32.gmra.mrb[0].mxu0 %v107
    %v175 = vpop.f32.mrb[0].mxu0
    %v176 = vadd.f32 0.0, %v175
    %v177 = vpop.f32.mrb[0].mxu0
    %178 = vdwg.mxu0
    %180 = vrot.lane.b32.xlu0 %v103, 124
    %v181 = vpop.permute.xlu0 %180
    %vm182 = vcmask 15360
    %v183 = vsel %vm182, %v103, 0
    %v185 = vsel %vm182, %v181, 0
    %187 = vmatprep.subr.mxu0 0.0
    %188 = vmatpush1.xpose.msra.mxu0 %v185
    %189 = vmatprep.subr.mxu0 0.0
    %190 = vmatpush1.xpose.msra.mxu0 0.0
    %191 = vmatprep.subr.mxu0 0.0
    %192 = vmatpush1.xpose.msra.mxu0 0.0
    %193 = vmatprep.subr.mxu0 0.0
    %194 = vmatpush1.xpose.msra.mxu0 0.0
    %195 = vmatprep.subr.mxu0 0.0
    %196 = vmatpush1.xpose.msra.mxu0 0.0
    %197 = vmatprep.subr.mxu0 0.0
    %198 = vmatpush1.xpose.msra.mxu0 0.0
    %199 = vmatprep.subr.mxu0 0.0
    %200 = vmatpush1.xpose.msra.mxu0 0.0
    %201 = vmatprep.subr.mxu0 0.0
    %202 = vmatpush1.xpose.msra.mxu0 0.0
    %203 = vmatprep.subr.mxu0 0.0
    %204 = vmatpush1.xpose.msra.mxu0 0.0
    %205 = vmatprep.subr.mxu0 0.0
    %206 = vmatpush1.xpose.msra.mxu0 0.0
    %207 = vmatprep.subr.mxu0 0.0
    %208 = vmatpush1.xpose.msra.mxu0 0.0
    %209 = vmatprep.subr.mxu0 0.0
    %210 = vmatpush1.xpose.msra.mxu0 0.0
    %211 = vmatprep.subr.mxu0 0.0
    %212 = vmatpush1.xpose.msra.mxu0 0.0
    %213 = vmatprep.subr.mxu0 0.0
    %214 = vmatpush1.xpose.msra.mxu0 0.0
    %215 = vmatprep.subr.mxu0 0.0
    %216 = vmatpush1.xpose.msra.mxu0 0.0
    %217 = vmatprep.subr.mxu0 0.0
    %218 = vmatpush1.xpose.msra.mxu0 0.0
    %219 = vmatprep.subr.mxu0 0.0
    %220 = vmatpush1.xpose.msra.mxu0 0.0
    %221 = vmatprep.subr.mxu0 0.0
    %222 = vmatpush1.xpose.msra.mxu0 0.0
    %223 = vmatprep.subr.mxu0 0.0
    %224 = vmatpush1.xpose.msra.mxu0 0.0
    %225 = vmatprep.subr.mxu0 0.0
    %226 = vmatpush1.xpose.msra.mxu0 0.0
    %227 = vmatprep.subr.mxu0 0.0
    %228 = vmatpush1.xpose.msra.mxu0 0.0
    %229 = vmatprep.subr.mxu0 0.0
    %230 = vmatpush1.xpose.msra.mxu0 0.0
    %231 = vmatprep.subr.mxu0 0.0
    %232 = vmatpush1.xpose.msra.mxu0 0.0
    %233 = vmatprep.subr.mxu0 0.0
    %234 = vmatpush1.xpose.msra.mxu0 0.0
    %235 = vmatprep.subr.mxu0 0.0
    %236 = vmatpush1.xpose.msra.mxu0 0.0
    %237 = vmatprep.subr.mxu0 0.0
    %238 = vmatpush1.xpose.msra.mxu0 0.0
    %239 = vmatprep.subr.mxu0 0.0
    %240 = vmatpush1.xpose.msra.mxu0 0.0
    %241 = vmatprep.subr.mxu0 0.0
    %242 = vmatpush1.xpose.msra.mxu0 0.0
    %243 = vmatprep.subr.mxu0 0.0
    %244 = vmatpush1.xpose.msra.mxu0 0.0
    %245 = vmatprep.subr.mxu0 0.0
    %246 = vmatpush1.xpose.msra.mxu0 0.0
    %247 = vmatprep.subr.mxu0 0.0
    %248 = vmatpush1.xpose.msra.mxu0 0.0
    %249 = vmatprep.subr.mxu0 0.0
    %250 = vmatpush1.xpose.msra.mxu0 0.0
    %251 = vmatprep.mubr.f32.mxu0 0.0
    %252 = vmatmul.mubr.f32.gmra.mrb[0].mxu0 %v183
    %v253 = vpop.f32.mrb[0].mxu0
    %v254 = vadd.f32 0.0, %v253
    %v255 = vpop.f32.mrb[0].mxu0
    %256 = vdwg.mxu0
    %258 = vrot.lane.b32.xlu0 %v176, 124
    %v259 = vpop.permute.xlu0 %258
    %v260 = vsel %vm182, %v176, 0
    %v262 = vsel %vm182, %v259, 0
    %264 = vmatprep.subr.mxu0 0.0
    %265 = vmatpush1.xpose.msra.mxu0 %v262
    %266 = vmatprep.subr.mxu0 0.0
    %267 = vmatpush1.xpose.msra.mxu0 0.0
    %268 = vmatprep.subr.mxu0 0.0
    %269 = vmatpush1.xpose.msra.mxu0 0.0
    %270 = vmatprep.subr.mxu0 0.0
    %271 = vmatpush1.xpose.msra.mxu0 0.0
    %272 = vmatprep.subr.mxu0 0.0
    %273 = vmatpush1.xpose.msra.mxu0 0.0
    %274 = vmatprep.subr.mxu0 0.0
    %275 = vmatpush1.xpose.msra.mxu0 0.0
    %276 = vmatprep.subr.mxu0 0.0
    %277 = vmatpush1.xpose.msra.mxu0 0.0
    %278 = vmatprep.subr.mxu0 0.0
    %279 = vmatpush1.xpose.msra.mxu0 0.0
    %280 = vmatprep.subr.mxu0 0.0
    %281 = vmatpush1.xpose.msra.mxu0 0.0
    %282 = vmatprep.subr.mxu0 0.0
    %283 = vmatpush1.xpose.msra.mxu0 0.0
    %284 = vmatprep.subr.mxu0 0.0
    %285 = vmatpush1.xpose.msra.mxu0 0.0
    %286 = vmatprep.subr.mxu0 0.0
    %287 = vmatpush1.xpose.msra.mxu0 0.0
    %288 = vmatprep.subr.mxu0 0.0
    %289 = vmatpush1.xpose.msra.mxu0 0.0
    %290 = vmatprep.subr.mxu0 0.0
    %291 = vmatpush1.xpose.msra.mxu0 0.0
    %292 = vmatprep.subr.mxu0 0.0
    %293 = vmatpush1.xpose.msra.mxu0 0.0
    %294 = vmatprep.subr.mxu0 0.0
    %295 = vmatpush1.xpose.msra.mxu0 0.0
    %296 = vmatprep.subr.mxu0 0.0
    %297 = vmatpush1.xpose.msra.mxu0 0.0
    %298 = vmatprep.subr.mxu0 0.0
    %299 = vmatpush1.xpose.msra.mxu0 0.0
    %300 = vmatprep.subr.mxu0 0.0
    %301 = vmatpush1.xpose.msra.mxu0 0.0
    %302 = vmatprep.subr.mxu0 0.0
    %303 = vmatpush1.xpose.msra.mxu0 0.0
    %304 = vmatprep.subr.mxu0 0.0
    %305 = vmatpush1.xpose.msra.mxu0 0.0
    %306 = vmatprep.subr.mxu0 0.0
    %307 = vmatpush1.xpose.msra.mxu0 0.0
    %308 = vmatprep.subr.mxu0 0.0
    %309 = vmatpush1.xpose.msra.mxu0 0.0
    %310 = vmatprep.subr.mxu0 0.0
    %311 = vmatpush1.xpose.msra.mxu0 0.0
    %312 = vmatprep.subr.mxu0 0.0
    %313 = vmatpush1.xpose.msra.mxu0 0.0
    %314 = vmatprep.subr.mxu0 0.0
    %315 = vmatpush1.xpose.msra.mxu0 0.0
    %316 = vmatprep.subr.mxu0 0.0
    %317 = vmatpush1.xpose.msra.mxu0 0.0
    %318 = vmatprep.subr.mxu0 0.0
    %319 = vmatpush1.xpose.msra.mxu0 0.0
    %320 = vmatprep.subr.mxu0 0.0
    %321 = vmatpush1.xpose.msra.mxu0 0.0
    %322 = vmatprep.subr.mxu0 0.0
    %323 = vmatpush1.xpose.msra.mxu0 0.0
    %324 = vmatprep.subr.mxu0 0.0
    %325 = vmatpush1.xpose.msra.mxu0 0.0
    %326 = vmatprep.subr.mxu0 0.0
    %327 = vmatpush1.xpose.msra.mxu0 0.0
    %328 = vmatprep.mubr.f32.mxu0 0.0
    %329 = vmatmul.mubr.f32.gmra.mrb[0].mxu0 %v260
    %v330 = vpop.f32.mrb[0].mxu0
    %v331 = vadd.f32 0.0, %v330
    %v332 = vpop.f32.mrb[0].mxu0
    %333 = vdwg.mxu0
    %v334 = vmul.f32 %v254, 0.70710677
    %v335 = vmul.f32 %v331, 0.70710677
    %vm336 = vcmask 27648
    %v337 = vsel %vm336, %v334, -inf
    %338 = vmax.xlane.f32.xlu0 %v337
    %v339 = vpop.xlane.xlu0 %338
    %v340 = vsel %vm336, %v335, -inf
    %341 = vmax.xlane.f32.xlu0 %v340
    %v342 = vpop.xlane.xlu0 %341
    %v343 = vsub.f32 %v334, %v339
    %v344 = vsub.f32 %v335, %v342
    %v345 = vmul.f32 %v343, 1.442695
    %v346 = vpow.pop %v345
    %v347 = vmul.f32 %v344, 1.442695
    %v348 = vpow.pop %v347
    %v349 = vsel %vm336, %v346, 0.0
    %350 = vadd.xlane.f32.xlu0 %v349
    %v351 = vpop.xlane.xlu0 %350
    %v352 = vsel %vm336, %v348, 0.0
    %353 = vadd.xlane.f32.xlu0 %v352
    %v354 = vpop.xlane.xlu0 %353
    %v355 = vrcp.pop %v351
    %v356 = vrcp.pop %v354
    %v357 = vmul.f32 %v346, %v355
    %v358 = vmul.f32 %v348, %v356
    %359 = vrot.lane.b32.xlu0 %v103, 120
    %v360 = vpop.permute.xlu0 %359
    %v362 = vsel %vm28, %v357, 0
    %v364 = vsel %vm32, %v360, 0
    %366 = vmatprep.subr.mxu0 0.0
    %367 = vmatpush1.msra.mxu0 %v364
    %368 = vmatprep.subr.mxu0 0.0
    %369 = vmatpush1.msra.mxu0 0.0
    %370 = vmatprep.subr.mxu0 0.0
    %371 = vmatpush1.msra.mxu0 0.0
    %372 = vmatprep.subr.mxu0 0.0
    %373 = vmatpush1.msra.mxu0 0.0
    %374 = vmatprep.subr.mxu0 0.0
    %375 = vmatpush1.msra.mxu0 0.0
    %376 = vmatprep.subr.mxu0 0.0
    %377 = vmatpush1.msra.mxu0 0.0
    %378 = vmatprep.subr.mxu0 0.0
    %379 = vmatpush1.msra.mxu0 0.0
    %380 = vmatprep.subr.mxu0 0.0
    %381 = vmatpush1.msra.mxu0 0.0
    %382 = vmatprep.subr.mxu0 0.0
    %383 = vmatpush1.msra.mxu0 0.0
    %384 = vmatprep.subr.mxu0 0.0
    %385 = vmatpush1.msra.mxu0 0.0
    %386 = vmatprep.subr.mxu0 0.0
    %387 = vmatpush1.msra.mxu0 0.0
    %388 = vmatprep.subr.mxu0 0.0
    %389 = vmatpush1.msra.mxu0 0.0
    %390 = vmatprep.subr.mxu0 0.0
    %391 = vmatpush1.msra.mxu0 0.0
    %392 = vmatprep.subr.mxu0 0.0
    %393 = vmatpush1.msra.mxu0 0.0
    %394 = vmatprep.subr.mxu0 0.0
    %395 = vmatpush1.msra.mxu0 0.0
    %396 = vmatprep.subr.mxu0 0.0
    %397 = vmatpush1.msra.mxu0 0.0
    %398 = vmatprep.subr.mxu0 0.0
    %399 = vmatpush1.msra.mxu0 0.0
    %400 = vmatprep.subr.mxu0 0.0
    %401 = vmatpush1.msra.mxu0 0.0
    %402 = vmatprep.subr.mxu0 0.0
    %403 = vmatpush1.msra.mxu0 0.0
    %404 = vmatprep.subr.mxu0 0.0
    %405 = vmatpush1.msra.mxu0 0.0
    %406 = vmatprep.subr.mxu0 0.0
    %407 = vmatpush1.msra.mxu0 0.0
    %408 = vmatprep.subr.mxu0 0.0
    %409 = vmatpush1.msra.mxu0 0.0
    %410 = vmatprep.subr.mxu0 0.0
    %411 = vmatpush1.msra.mxu0 0.0
    %412 = vmatprep.subr.mxu0 0.0
    %413 = vmatpush1.msra.mxu0 0.0
    %414 = vmatprep.subr.mxu0 0.0
    %415 = vmatpush1.msra.mxu0 0.0
    %416 = vmatprep.subr.mxu0 0.0
    %417 = vmatpush1.msra.mxu0 0.0
    %418 = vmatprep.subr.mxu0 0.0
    %419 = vmatpush1.msra.mxu0 0.0
    %420 = vmatprep.subr.mxu0 0.0
    %421 = vmatpush1.msra.mxu0 0.0
    %422 = vmatprep.subr.mxu0 0.0
    %423 = vmatpush1.msra.mxu0 0.0
    %424 = vmatprep.subr.mxu0 0.0
    %425 = vmatpush1.msra.mxu0 0.0
    %426 = vmatprep.subr.mxu0 0.0
    %427 = vmatpush1.msra.mxu0 0.0
    %428 = vmatprep.subr.mxu0 0.0
    %429 = vmatpush1.msra.mxu0 0.0
    %430 = vmatprep.mubr.f32.mxu0 0.0
    %431 = vmatmul.mubr.f32.gmra.mrb[0].mxu0 %v362
    %v432 = vpop.f32.mrb[0].mxu0
    %v433 = vadd.f32 0.0, %v432
    %v434 = vpop.f32.mrb[0].mxu0
    %435 = vdwg.mxu0
    %436 = vrot.lane.b32.xlu0 %v176, 120
    %v437 = vpop.permute.xlu0 %436
    %v439 = vsel %vm28, %v358, 0
    %v441 = vsel %vm32, %v437, 0
    %443 = vmatprep.subr.mxu0 0.0
    %444 = vmatpush1.msra.mxu0 %v441
    %445 = vmatprep.subr.mxu0 0.0
    %446 = vmatpush1.msra.mxu0 0.0
    %447 = vmatprep.subr.mxu0 0.0
    %448 = vmatpush1.msra.mxu0 0.0
    %449 = vmatprep.subr.mxu0 0.0
    %450 = vmatpush1.msra.mxu0 0.0
    %451 = vmatprep.subr.mxu0 0.0
    %452 = vmatpush1.msra.mxu0 0.0
    %453 = vmatprep.subr.mxu0 0.0
    %454 = vmatpush1.msra.mxu0 0.0
    %455 = vmatprep.subr.mxu0 0.0
    %456 = vmatpush1.msra.mxu0 0.0
    %457 = vmatprep.subr.mxu0 0.0
    %458 = vmatpush1.msra.mxu0 0.0
    %459 = vmatprep.subr.mxu0 0.0
    %460 = vmatpush1.msra.mxu0 0.0
    %461 = vmatprep.subr.mxu0 0.0
    %462 = vmatpush1.msra.mxu0 0.0
    %463 = vmatprep.subr.mxu0 0.0
    %464 = vmatpush1.msra.mxu0 0.0
    %465 = vmatprep.subr.mxu0 0.0
    %466 = vmatpush1.msra.mxu0 0.0
    %467 = vmatprep.subr.mxu0 0.0
    %468 = vmatpush1.msra.mxu0 0.0
    %469 = vmatprep.subr.mxu0 0.0
    %470 = vmatpush1.msra.mxu0 0.0
    %471 = vmatprep.subr.mxu0 0.0
    %472 = vmatpush1.msra.mxu0 0.0
    %473 = vmatprep.subr.mxu0 0.0
    %474 = vmatpush1.msra.mxu0 0.0
    %475 = vmatprep.subr.mxu0 0.0
    %476 = vmatpush1.msra.mxu0 0.0
    %477 = vmatprep.subr.mxu0 0.0
    %478 = vmatpush1.msra.mxu0 0.0
    %479 = vmatprep.subr.mxu0 0.0
    %480 = vmatpush1.msra.mxu0 0.0
    %481 = vmatprep.subr.mxu0 0.0
    %482 = vmatpush1.msra.mxu0 0.0
    %483 = vmatprep.subr.mxu0 0.0
    %484 = vmatpush1.msra.mxu0 0.0
    %485 = vmatprep.subr.mxu0 0.0
    %486 = vmatpush1.msra.mxu0 0.0
    %487 = vmatprep.subr.mxu0 0.0
    %488 = vmatpush1.msra.mxu0 0.0
    %489 = vmatprep.subr.mxu0 0.0
    %490 = vmatpush1.msra.mxu0 0.0
    %491 = vmatprep.subr.mxu0 0.0
    %492 = vmatpush1.msra.mxu0 0.0
    %493 = vmatprep.subr.mxu0 0.0
    %494 = vmatpush1.msra.mxu0 0.0
    %495 = vmatprep.subr.mxu0 0.0
    %496 = vmatpush1.msra.mxu0 0.0
    %497 = vmatprep.subr.mxu0 0.0
    %498 = vmatpush1.msra.mxu0 0.0
    %499 = vmatprep.subr.mxu0 0.0
    %500 = vmatpush1.msra.mxu0 0.0
    %501 = vmatprep.subr.mxu0 0.0
    %502 = vmatpush1.msra.mxu0 0.0
    %503 = vmatprep.subr.mxu0 0.0
    %504 = vmatpush1.msra.mxu0 0.0
    %505 = vmatprep.subr.mxu0 0.0
    %506 = vmatpush1.msra.mxu0 0.0
    %507 = vmatprep.mubr.f32.mxu0 0.0
    %508 = vmatmul.mubr.f32.gmra.mrb[0].mxu0 %v439
    %v509 = vpop.f32.mrb[0].mxu0
    %v510 = vadd.f32 0.0, %v509
    %v511 = vpop.f32.mrb[0].mxu0
    %512 = vdwg.mxu0
    %513 = vrot.lane.b32.xlu0 %v103, 126
    %v514 = vpop.permute.xlu0 %513
    %515 = vrot.lane.b32.xlu0 %v103, 122
    %v516 = vpop.permute.xlu0 %515
    %v517 = vsel %vm182, %v514, 0
    %v519 = vsel %vm182, %v516, 0
    %521 = vmatprep.subr.mxu0 0.0
    %522 = vmatpush1.xpose.msra.mxu0 %v519
    %523 = vmatprep.subr.mxu0 0.0
    %524 = vmatpush1.xpose.msra.mxu0 0.0
    %525 = vmatprep.subr.mxu0 0.0
    %526 = vmatpush1.xpose.msra.mxu0 0.0
    %527 = vmatprep.subr.mxu0 0.0
    %528 = vmatpush1.xpose.msra.mxu0 0.0
    %529 = vmatprep.subr.mxu0 0.0
    %530 = vmatpush1.xpose.msra.mxu0 0.0
    %531 = vmatprep.subr.mxu0 0.0
    %532 = vmatpush1.xpose.msra.mxu0 0.0
    %533 = vmatprep.subr.mxu0 0.0
    %534 = vmatpush1.xpose.msra.mxu0 0.0
    %535 = vmatprep.subr.mxu0 0.0
    %536 = vmatpush1.xpose.msra.mxu0 0.0
    %537 = vmatprep.subr.mxu0 0.0
    %538 = vmatpush1.xpose.msra.mxu0 0.0
    %539 = vmatprep.subr.mxu0 0.0
    %540 = vmatpush1.xpose.msra.mxu0 0.0
    %541 = vmatprep.subr.mxu0 0.0
    %542 = vmatpush1.xpose.msra.mxu0 0.0
    %543 = vmatprep.subr.mxu0 0.0
    %544 = vmatpush1.xpose.msra.mxu0 0.0
    %545 = vmatprep.subr.mxu0 0.0
    %546 = vmatpush1.xpose.msra.mxu0 0.0
    %547 = vmatprep.subr.mxu0 0.0
    %548 = vmatpush1.xpose.msra.mxu0 0.0
    %549 = vmatprep.subr.mxu0 0.0
    %550 = vmatpush1.xpose.msra.mxu0 0.0
    %551 = vmatprep.subr.mxu0 0.0
    %552 = vmatpush1.xpose.msra.mxu0 0.0
    %553 = vmatprep.subr.mxu0 0.0
    %554 = vmatpush1.xpose.msra.mxu0 0.0
    %555 = vmatprep.subr.mxu0 0.0
    %556 = vmatpush1.xpose.msra.mxu0 0.0
    %557 = vmatprep.subr.mxu0 0.0
    %558 = vmatpush1.xpose.msra.mxu0 0.0
    %559 = vmatprep.subr.mxu0 0.0
    %560 = vmatpush1.xpose.msra.mxu0 0.0
    %561 = vmatprep.subr.mxu0 0.0
    %562 = vmatpush1.xpose.msra.mxu0 0.0
    %563 = vmatprep.subr.mxu0 0.0
    %564 = vmatpush1.xpose.msra.mxu0 0.0
    %565 = vmatprep.subr.mxu0 0.0
    %566 = vmatpush1.xpose.msra.mxu0 0.0
    %567 = vmatprep.subr.mxu0 0.0
    %568 = vmatpush1.xpose.msra.mxu0 0.0
    %569 = vmatprep.subr.mxu0 0.0
    %570 = vmatpush1.xpose.msra.mxu0 0.0
    %571 = vmatprep.subr.mxu0 0.0
    %572 = vmatpush1.xpose.msra.mxu0 0.0
    %573 = vmatprep.subr.mxu0 0.0
    %574 = vmatpush1.xpose.msra.mxu0 0.0
    %575 = vmatprep.subr.mxu0 0.0
    %576 = vmatpush1.xpose.msra.mxu0 0.0
    %577 = vmatprep.subr.mxu0 0.0
    %578 = vmatpush1.xpose.msra.mxu0 0.0
    %579 = vmatprep.subr.mxu0 0.0
    %580 = vmatpush1.xpose.msra.mxu0 0.0
    %581 = vmatprep.subr.mxu0 0.0
    %582 = vmatpush1.xpose.msra.mxu0 0.0
    %583 = vmatprep.subr.mxu0 0.0
    %584 = vmatpush1.xpose.msra.mxu0 0.0
    %585 = vmatprep.mubr.f32.mxu0 0.0
    %586 = vmatmul.mubr.f32.gmra.mrb[0].mxu0 %v517
    %v587 = vpop.f32.mrb[0].mxu0
    %v588 = vadd.f32 0.0, %v587
    %v589 = vpop.f32.mrb[0].mxu0
    %590 = vdwg.mxu0
    %591 = vrot.lane.b32.xlu0 %v176, 126
    %v592 = vpop.permute.xlu0 %591
    %593 = vrot.lane.b32.xlu0 %v176, 122
    %v594 = vpop.permute.xlu0 %593
    %v595 = vsel %vm182, %v592, 0
    %v597 = vsel %vm182, %v594, 0
    %599 = vmatprep.subr.mxu0 0.0
    %600 = vmatpush1.xpose.msra.mxu0 %v597
    %601 = vmatprep.subr.mxu0 0.0
    %602 = vmatpush1.xpose.msra.mxu0 0.0
    %603 = vmatprep.subr.mxu0 0.0
    %604 = vmatpush1.xpose.msra.mxu0 0.0
    %605 = vmatprep.subr.mxu0 0.0
    %606 = vmatpush1.xpose.msra.mxu0 0.0
    %607 = vmatprep.subr.mxu0 0.0
    %608 = vmatpush1.xpose.msra.mxu0 0.0
    %609 = vmatprep.subr.mxu0 0.0
    %610 = vmatpush1.xpose.msra.mxu0 0.0
    %611 = vmatprep.subr.mxu0 0.0
    %612 = vmatpush1.xpose.msra.mxu0 0.0
    %613 = vmatprep.subr.mxu0 0.0
    %614 = vmatpush1.xpose.msra.mxu0 0.0
    %615 = vmatprep.subr.mxu0 0.0
    %616 = vmatpush1.xpose.msra.mxu0 0.0
    %617 = vmatprep.subr.mxu0 0.0
    %618 = vmatpush1.xpose.msra.mxu0 0.0
    %619 = vmatprep.subr.mxu0 0.0
    %620 = vmatpush1.xpose.msra.mxu0 0.0
    %621 = vmatprep.subr.mxu0 0.0
    %622 = vmatpush1.xpose.msra.mxu0 0.0
    %623 = vmatprep.subr.mxu0 0.0
    %624 = vmatpush1.xpose.msra.mxu0 0.0
    %625 = vmatprep.subr.mxu0 0.0
    %626 = vmatpush1.xpose.msra.mxu0 0.0
    %627 = vmatprep.subr.mxu0 0.0
    %628 = vmatpush1.xpose.msra.mxu0 0.0
    %629 = vmatprep.subr.mxu0 0.0
    %630 = vmatpush1.xpose.msra.mxu0 0.0
    %631 = vmatprep.subr.mxu0 0.0
    %632 = vmatpush1.xpose.msra.mxu0 0.0
    %633 = vmatprep.subr.mxu0 0.0
    %634 = vmatpush1.xpose.msra.mxu0 0.0
    %635 = vmatprep.subr.mxu0 0.0
    %636 = vmatpush1.xpose.msra.mxu0 0.0
    %637 = vmatprep.subr.mxu0 0.0
    %638 = vmatpush1.xpose.msra.mxu0 0.0
    %639 = vmatprep.subr.mxu0 0.0
    %640 = vmatpush1.xpose.msra.mxu0 0.0
    %641 = vmatprep.subr.mxu0 0.0
    %642 = vmatpush1.xpose.msra.mxu0 0.0
    %643 = vmatprep.subr.mxu0 0.0
    %644 = vmatpush1.xpose.msra.mxu0 0.0
    %645 = vmatprep.subr.mxu0 0.0
    %646 = vmatpush1.xpose.msra.mxu0 0.0
    %647 = vmatprep.subr.mxu0 0.0
    %648 = vmatpush1.xpose.msra.mxu0 0.0
    %649 = vmatprep.subr.mxu0 0.0
    %650 = vmatpush1.xpose.msra.mxu0 0.0
    %651 = vmatprep.subr.mxu0 0.0
    %652 = vmatpush1.xpose.msra.mxu0 0.0
    %653 = vmatprep.subr.mxu0 0.0
    %654 = vmatpush1.xpose.msra.mxu0 0.0
    %655 = vmatprep.subr.mxu0 0.0
    %656 = vmatpush1.xpose.msra.mxu0 0.0
    %657 = vmatprep.subr.mxu0 0.0
    %658 = vmatpush1.xpose.msra.mxu0 0.0
    %659 = vmatprep.subr.mxu0 0.0
    %660 = vmatpush1.xpose.msra.mxu0 0.0
    %661 = vmatprep.subr.mxu0 0.0
    %662 = vmatpush1.xpose.msra.mxu0 0.0
    %663 = vmatprep.mubr.f32.mxu0 0.0
    %664 = vmatmul.mubr.f32.gmra.mrb[0].mxu0 %v595
    %v665 = vpop.f32.mrb[0].mxu0
    %v666 = vadd.f32 0.0, %v665
    %v667 = vpop.f32.mrb[0].mxu0
    %668 = vdwg.mxu0
    %v669 = vmul.f32 %v588, 0.70710677
    %v670 = vmul.f32 %v666, 0.70710677
    %v671 = vsel %vm336, %v669, -inf
    %672 = vmax.xlane.f32.xlu0 %v671
    %v673 = vpop.xlane.xlu0 %672
    %v674 = vsel %vm336, %v670, -inf
    %675 = vmax.xlane.f32.xlu0 %v674
    %v676 = vpop.xlane.xlu0 %675
    %v677 = vsub.f32 %v669, %v673
    %v678 = vsub.f32 %v670, %v676
    %v679 = vmul.f32 %v677, 1.442695
    %v680 = vpow.pop %v679
    %v681 = vmul.f32 %v678, 1.442695
    %v682 = vpow.pop %v681
    %v683 = vsel %vm336, %v680, 0.0
    %684 = vadd.xlane.f32.xlu0 %v683
    %v685 = vpop.xlane.xlu0 %684
    %v686 = vsel %vm336, %v682, 0.0
    %687 = vadd.xlane.f32.xlu0 %v686
    %v688 = vpop.xlane.xlu0 %687
    %v689 = vrcp.pop %v685
    %v690 = vrcp.pop %v688
    %v691 = vmul.f32 %v680, %v689
    %v692 = vmul.f32 %v682, %v690
    %693 = vrot.lane.b32.xlu0 %v103, 118
    %v694 = vpop.permute.xlu0 %693
    %v696 = vsel %vm28, %v691, 0
    %v698 = vsel %vm32, %v694, 0
    %700 = vmatprep.subr.mxu0 0.0
    %701 = vmatpush1.msra.mxu0 %v698
    %702 = vmatprep.subr.mxu0 0.0
    %703 = vmatpush1.msra.mxu0 0.0
    %704 = vmatprep.subr.mxu0 0.0
    %705 = vmatpush1.msra.mxu0 0.0
    %706 = vmatprep.subr.mxu0 0.0
    %707 = vmatpush1.msra.mxu0 0.0
    %708 = vmatprep.subr.mxu0 0.0
    %709 = vmatpush1.msra.mxu0 0.0
    %710 = vmatprep.subr.mxu0 0.0
    %711 = vmatpush1.msra.mxu0 0.0
    %712 = vmatprep.subr.mxu0 0.0
    %713 = vmatpush1.msra.mxu0 0.0
    %714 = vmatprep.subr.mxu0 0.0
    %715 = vmatpush1.msra.mxu0 0.0
    %716 = vmatprep.subr.mxu0 0.0
    %717 = vmatpush1.msra.mxu0 0.0
    %718 = vmatprep.subr.mxu0 0.0
    %719 = vmatpush1.msra.mxu0 0.0
    %720 = vmatprep.subr.mxu0 0.0
    %721 = vmatpush1.msra.mxu0 0.0
    %722 = vmatprep.subr.mxu0 0.0
    %723 = vmatpush1.msra.mxu0 0.0
    %724 = vmatprep.subr.mxu0 0.0
    %725 = vmatpush1.msra.mxu0 0.0
    %726 = vmatprep.subr.mxu0 0.0
    %727 = vmatpush1.msra.mxu0 0.0
    %728 = vmatprep.subr.mxu0 0.0
    %729 = vmatpush1.msra.mxu0 0.0
    %730 = vmatprep.subr.mxu0 0.0
    %731 = vmatpush1.msra.mxu0 0.0
    %732 = vmatprep.subr.mxu0 0.0
    %733 = vmatpush1.msra.mxu0 0.0
    %734 = vmatprep.subr.mxu0 0.0
    %735 = vmatpush1.msra.mxu0 0.0
    %736 = vmatprep.subr.mxu0 0.0
    %737 = vmatpush1.msra.mxu0 0.0
    %738 = vmatprep.subr.mxu0 0.0
    %739 = vmatpush1.msra.mxu0 0.0
    %740 = vmatprep.subr.mxu0 0.0
    %741 = vmatpush1.msra.mxu0 0.0
    %742 = vmatprep.subr.mxu0 0.0
    %743 = vmatpush1.msra.mxu0 0.0
    %744 = vmatprep.subr.mxu0 0.0
    %745 = vmatpush1.msra.mxu0 0.0
    %746 = vmatprep.subr.mxu0 0.0
    %747 = vmatpush1.msra.mxu0 0.0
    %748 = vmatprep.subr.mxu0 0.0
    %749 = vmatpush1.msra.mxu0 0.0
    %750 = vmatprep.subr.mxu0 0.0
    %751 = vmatpush1.msra.mxu0 0.0
    %752 = vmatprep.subr.mxu0 0.0
    %753 = vmatpush1.msra.mxu0 0.0
    %754 = vmatprep.subr.mxu0 0.0
    %755 = vmatpush1.msra.mxu0 0.0
    %756 = vmatprep.subr.mxu0 0.0
    %757 = vmatpush1.msra.mxu0 0.0
    %758 = vmatprep.subr.mxu0 0.0
    %759 = vmatpush1.msra.mxu0 0.0
    %760 = vmatprep.subr.mxu0 0.0
    %761 = vmatpush1.msra.mxu0 0.0
    %762 = vmatprep.subr.mxu0 0.0
    %763 = vmatpush1.msra.mxu0 0.0
    %764 = vmatprep.mubr.f32.mxu0 0.0
    %765 = vmatmul.mubr.f32.gmra.mrb[0].mxu0 %v696
    %v766 = vpop.f32.mrb[0].mxu0
    %v767 = vadd.f32 0.0, %v766
    %v768 = vpop.f32.mrb[0].mxu0
    %769 = vdwg.mxu0
    %770 = vrot.lane.b32.xlu0 %v176, 118
    %v771 = vpop.permute.xlu0 %770
    %v773 = vsel %vm28, %v692, 0
    %v775 = vsel %vm32, %v771, 0
    %777 = vmatprep.subr.mxu0 0.0
    %778 = vmatpush1.msra.mxu0 %v775
    %779 = vmatprep.subr.mxu0 0.0
    %780 = vmatpush1.msra.mxu0 0.0
    %781 = vmatprep.subr.mxu0 0.0
    %782 = vmatpush1.msra.mxu0 0.0
    %783 = vmatprep.subr.mxu0 0.0
    %784 = vmatpush1.msra.mxu0 0.0
    %785 = vmatprep.subr.mxu0 0.0
    %786 = vmatpush1.msra.mxu0 0.0
    %787 = vmatprep.subr.mxu0 0.0
    %788 = vmatpush1.msra.mxu0 0.0
    %789 = vmatprep.subr.mxu0 0.0
    %790 = vmatpush1.msra.mxu0 0.0
    %791 = vmatprep.subr.mxu0 0.0
    %792 = vmatpush1.msra.mxu0 0.0
    %793 = vmatprep.subr.mxu0 0.0
    %794 = vmatpush1.msra.mxu0 0.0
    %795 = vmatprep.subr.mxu0 0.0
    %796 = vmatpush1.msra.mxu0 0.0
    %797 = vmatprep.subr.mxu0 0.0
    %798 = vmatpush1.msra.mxu0 0.0
    %799 = vmatprep.subr.mxu0 0.0
    %800 = vmatpush1.msra.mxu0 0.0
    %801 = vmatprep.subr.mxu0 0.0
    %802 = vmatpush1.msra.mxu0 0.0
    %803 = vmatprep.subr.mxu0 0.0
    %804 = vmatpush1.msra.mxu0 0.0
    %805 = vmatprep.subr.mxu0 0.0
    %806 = vmatpush1.msra.mxu0 0.0
    %807 = vmatprep.subr.mxu0 0.0
    %808 = vmatpush1.msra.mxu0 0.0
    %809 = vmatprep.subr.mxu0 0.0
    %810 = vmatpush1.msra.mxu0 0.0
    %811 = vmatprep.subr.mxu0 0.0
    %812 = vmatpush1.msra.mxu0 0.0
    %813 = vmatprep.subr.mxu0 0.0
    %814 = vmatpush1.msra.mxu0 0.0
    %815 = vmatprep.subr.mxu0 0.0
    %816 = vmatpush1.msra.mxu0 0.0
    %817 = vmatprep.subr.mxu0 0.0
    %818 = vmatpush1.msra.mxu0 0.0
    %819 = vmatprep.subr.mxu0 0.0
    %820 = vmatpush1.msra.mxu0 0.0
    %821 = vmatprep.subr.mxu0 0.0
    %822 = vmatpush1.msra.mxu0 0.0
    %823 = vmatprep.subr.mxu0 0.0
    %824 = vmatpush1.msra.mxu0 0.0
    %825 = vmatprep.subr.mxu0 0.0
    %826 = vmatpush1.msra.mxu0 0.0
    %827 = vmatprep.subr.mxu0 0.0
    %828 = vmatpush1.msra.mxu0 0.0
    %829 = vmatprep.subr.mxu0 0.0
    %830 = vmatpush1.msra.mxu0 0.0
    %831 = vmatprep.subr.mxu0 0.0
    %832 = vmatpush1.msra.mxu0 0.0
    %833 = vmatprep.subr.mxu0 0.0
    %834 = vmatpush1.msra.mxu0 0.0
    %835 = vmatprep.subr.mxu0 0.0
    %836 = vmatpush1.msra.mxu0 0.0
    %837 = vmatprep.subr.mxu0 0.0
    %838 = vmatpush1.msra.mxu0 0.0
    %839 = vmatprep.subr.mxu0 0.0
    %840 = vmatpush1.msra.mxu0 0.0
    %841 = vmatprep.mubr.f32.mxu0 0.0
    %842 = vmatmul.mubr.f32.gmra.mrb[0].mxu0 %v773
    %v843 = vpop.f32.mrb[0].mxu0
    %v844 = vadd.f32 0.0, %v843
    %v845 = vpop.f32.mrb[0].mxu0
    %846 = vdwg.mxu0
    %v848 = vrot.slane %v26, 2
    %v850 = vsel %vm182, %v767, 0
    %vm852 = vcmask 1041408
    %v853 = vsel %vm852, %v848, 0
    %855 = vmatprep.subr.mxu0 0.0
    %856 = vmatpush1.msra.mxu0 %v853
    %857 = vmatprep.subr.mxu0 0.0
    %858 = vmatpush1.msra.mxu0 0.0
    %859 = vmatprep.subr.mxu0 0.0
    %860 = vmatpush1.msra.mxu0 0.0
    %861 = vmatprep.subr.mxu0 0.0
    %862 = vmatpush1.msra.mxu0 0.0
    %863 = vmatprep.subr.mxu0 0.0
    %864 = vmatpush1.msra.mxu0 0.0
    %865 = vmatprep.subr.mxu0 0.0
    %866 = vmatpush1.msra.mxu0 0.0
    %867 = vmatprep.subr.mxu0 0.0
    %868 = vmatpush1.msra.mxu0 0.0
    %869 = vmatprep.subr.mxu0 0.0
    %870 = vmatpush1.msra.mxu0 0.0
    %871 = vmatprep.subr.mxu0 0.0
    %872 = vmatpush1.msra.mxu0 0.0
    %873 = vmatprep.subr.mxu0 0.0
    %874 = vmatpush1.msra.mxu0 0.0
    %875 = vmatprep.subr.mxu0 0.0
    %876 = vmatpush1.msra.mxu0 0.0
    %877 = vmatprep.subr.mxu0 0.0
    %878 = vmatpush1.msra.mxu0 0.0
    %879 = vmatprep.subr.mxu0 0.0
    %880 = vmatpush1.msra.mxu0 0.0
    %881 = vmatprep.subr.mxu0 0.0
    %882 = vmatpush1.msra.mxu0 0.0
    %883 = vmatprep.subr.mxu0 0.0
    %884 = vmatpush1.msra.mxu0 0.0
    %885 = vmatprep.subr.mxu0 0.0
    %886 = vmatpush1.msra.mxu0 0.0
    %887 = vmatprep.subr.mxu0 0.0
    %888 = vmatpush1.msra.mxu0 0.0
    %889 = vmatprep.subr.mxu0 0.0
    %890 = vmatpush1.msra.mxu0 0.0
    %891 = vmatprep.subr.mxu0 0.0
    %892 = vmatpush1.msra.mxu0 0.0
    %893 = vmatprep.subr.mxu0 0.0
    %894 = vmatpush1.msra.mxu0 0.0
    %895 = vmatprep.subr.mxu0 0.0
    %896 = vmatpush1.msra.mxu0 0.0
    %897 = vmatprep.subr.mxu0 0.0
    %898 = vmatpush1.msra.mxu0 0.0
    %899 = vmatprep.subr.mxu0 0.0
    %900 = vmatpush1.msra.mxu0 0.0
    %901 = vmatprep.subr.mxu0 0.0
    %902 = vmatpush1.msra.mxu0 0.0
    %903 = vmatprep.subr.mxu0 0.0
    %904 = vmatpush1.msra.mxu0 0.0
    %905 = vmatprep.subr.mxu0 0.0
    %906 = vmatpush1.msra.mxu0 0.0
    %907 = vmatprep.subr.mxu0 0.0
    %908 = vmatpush1.msra.mxu0 0.0
    %909 = vmatprep.subr.mxu0 0.0
    %910 = vmatpush1.msra.mxu0 0.0
    %911 = vmatprep.subr.mxu0 0.0
    %912 = vmatpush1.msra.mxu0 0.0
    %913 = vmatprep.subr.mxu0 0.0
    %914 = vmatpush1.msra.mxu0 0.0
    %915 = vmatprep.subr.mxu0 0.0
    %916 = vmatpush1.msra.mxu0 0.0
    %917 = vmatprep.subr.mxu0 0.0
    %918 = vmatpush1.msra.mxu0 0.0
    %919 = vmatprep.mubr.f32.mxu0 0.0
    %920 = vmatmul.mubr.f32.gmra.mrb[0].mxu0 %v850
    %v921 = vpop.f32.mrb[0].mxu0
    %v922 = vadd.f32 0.0, %v921
    %v923 = vpop.f32.mrb[0].mxu0
    %924 = vdwg.mxu0
    %v926 = vsel %vm182, %v844, 0
    %928 = vmatprep.subr.mxu0 0.0
    %929 = vmatpush1.msra.mxu0 %v853
    %930 = vmatprep.subr.mxu0 0.0
    %931 = vmatpush1.msra.mxu0 0.0
    %932 = vmatprep.subr.mxu0 0.0
    %933 = vmatpush1.msra.mxu0 0.0
    %934 = vmatprep.subr.mxu0 0.0
    %935 = vmatpush1.msra.mxu0 0.0
    %936 = vmatprep.subr.mxu0 0.0
    %937 = vmatpush1.msra.mxu0 0.0
    %938 = vmatprep.subr.mxu0 0.0
    %939 = vmatpush1.msra.mxu0 0.0
    %940 = vmatprep.subr.mxu0 0.0
    %941 = vmatpush1.msra.mxu0 0.0
    %942 = vmatprep.subr.mxu0 0.0
    %943 = vmatpush1.msra.mxu0 0.0
    %944 = vmatprep.subr.mxu0 0.0
    %945 = vmatpush1.msra.mxu0 0.0
    %946 = vmatprep.subr.mxu0 0.0
    %947 = vmatpush1.msra.mxu0 0.0
    %948 = vmatprep.subr.mxu0 0.0
    %949 = vmatpush1.msra.mxu0 0.0
    %950 = vmatprep.subr.mxu0 0.0
    %951 = vmatpush1.msra.mxu0 0.0
    %952 = vmatprep.subr.mxu0 0.0
    %953 = vmatpush1.msra.mxu0 0.0
    %954 = vmatprep.subr.mxu0 0.0
    %955 = vmatpush1.msra.mxu0 0.0
    %956 = vmatprep.subr.mxu0 0.0
    %957 = vmatpush1.msra.mxu0 0.0
    %958 = vmatprep.subr.mxu0 0.0
    %959 = vmatpush1.msra.mxu0 0.0
    %960 = vmatprep.subr.mxu0 0.0
    %961 = vmatpush1.msra.mxu0 0.0
    %962 = vmatprep.subr.mxu0 0.0
    %963 = vmatpush1.msra.mxu0 0.0
    %964 = vmatprep.subr.mxu0 0.0
    %965 = vmatpush1.msra.mxu0 0.0
    %966 = vmatprep.subr.mxu0 0.0
    %967 = vmatpush1.msra.mxu0 0.0
    %968 = vmatprep.subr.mxu0 0.0
    %969 = vmatpush1.msra.mxu0 0.0
    %970 = vmatprep.subr.mxu0 0.0
    %971 = vmatpush1.msra.mxu0 0.0
    %972 = vmatprep.subr.mxu0 0.0
    %973 = vmatpush1.msra.mxu0 0.0
    %974 = vmatprep.subr.mxu0 0.0
    %975 = vmatpush1.msra.mxu0 0.0
    %976 = vmatprep.subr.mxu0 0.0
    %977 = vmatpush1.msra.mxu0 0.0
    %978 = vmatprep.subr.mxu0 0.0
    %979 = vmatpush1.msra.mxu0 0.0
    %980 = vmatprep.subr.mxu0 0.0
    %981 = vmatpush1.msra.mxu0 0.0
    %982 = vmatprep.subr.mxu0 0.0
    %983 = vmatpush1.msra.mxu0 0.0
    %984 = vmatprep.subr.mxu0 0.0
    %985 = vmatpush1.msra.mxu0 0.0
    %986 = vmatprep.subr.mxu0 0.0
    %987 = vmatpush1.msra.mxu0 0.0
    %988 = vmatprep.subr.mxu0 0.0
    %989 = vmatpush1.msra.mxu0 0.0
    %990 = vmatprep.subr.mxu0 0.0
    %991 = vmatpush1.msra.mxu0 0.0
    %992 = vmatprep.mubr.f32.mxu0 0.0
    %993 = vmatmul.mubr.f32.gmra.mrb[0].mxu0 %v926
    %v994 = vpop.f32.mrb[0].mxu0
    %v995 = vadd.f32 0.0, %v994
    %v996 = vpop.f32.mrb[0].mxu0
    %997 = vdwg.mxu0
    %v999 = vsel %vm182, %v433, 0
    %v1001 = vsel %vm852, %v26, 0
    %1003 = vmatprep.subr.mxu0 0.0
    %1004 = vmatpush1.msra.mxu0 %v1001
    %1005 = vmatprep.subr.mxu0 0.0
    %1006 = vmatpush1.msra.mxu0 0.0
    %1007 = vmatprep.subr.mxu0 0.0
    %1008 = vmatpush1.msra.mxu0 0.0
    %1009 = vmatprep.subr.mxu0 0.0
    %1010 = vmatpush1.msra.mxu0 0.0
    %1011 = vmatprep.subr.mxu0 0.0
    %1012 = vmatpush1.msra.mxu0 0.0
    %1013 = vmatprep.subr.mxu0 0.0
    %1014 = vmatpush1.msra.mxu0 0.0
    %1015 = vmatprep.subr.mxu0 0.0
    %1016 = vmatpush1.msra.mxu0 0.0
    %1017 = vmatprep.subr.mxu0 0.0
    %1018 = vmatpush1.msra.mxu0 0.0
    %1019 = vmatprep.subr.mxu0 0.0
    %1020 = vmatpush1.msra.mxu0 0.0
    %1021 = vmatprep.subr.mxu0 0.0
    %1022 = vmatpush1.msra.mxu0 0.0
    %1023 = vmatprep.subr.mxu0 0.0
    %1024 = vmatpush1.msra.mxu0 0.0
    %1025 = vmatprep.subr.mxu0 0.0
    %1026 = vmatpush1.msra.mxu0 0.0
    %1027 = vmatprep.subr.mxu0 0.0
    %1028 = vmatpush1.msra.mxu0 0.0
    %1029 = vmatprep.subr.mxu0 0.0
    %1030 = vmatpush1.msra.mxu0 0.0
    %1031 = vmatprep.subr.mxu0 0.0
    %1032 = vmatpush1.msra.mxu0 0.0
    %1033 = vmatprep.subr.mxu0 0.0
    %1034 = vmatpush1.msra.mxu0 0.0
    %1035 = vmatprep.subr.mxu0 0.0
    %1036 = vmatpush1.msra.mxu0 0.0
    %1037 = vmatprep.subr.mxu0 0.0
    %1038 = vmatpush1.msra.mxu0 0.0
    %1039 = vmatprep.subr.mxu0 0.0
    %1040 = vmatpush1.msra.mxu0 0.0
    %1041 = vmatprep.subr.mxu0 0.0
    %1042 = vmatpush1.msra.mxu0 0.0
    %1043 = vmatprep.subr.mxu0 0.0
    %1044 = vmatpush1.msra.mxu0 0.0
    %1045 = vmatprep.subr.mxu0 0.0
    %1046 = vmatpush1.msra.mxu0 0.0
    %1047 = vmatprep.subr.mxu0 0.0
    %1048 = vmatpush1.msra.mxu0 0.0
    %1049 = vmatprep.subr.mxu0 0.0
    %1050 = vmatpush1.msra.mxu0 0.0
    %1051 = vmatprep.subr.mxu0 0.0
    %1052 = vmatpush1.msra.mxu0 0.0
    %1053 = vmatprep.subr.mxu0 0.0
    %1054 = vmatpush1.msra.mxu0 0.0
    %1055 = vmatprep.subr.mxu0 0.0
    %1056 = vmatpush1.msra.mxu0 0.0
    %1057 = vmatprep.subr.mxu0 0.0
    %1058 = vmatpush1.msra.mxu0 0.0
    %1059 = vmatprep.subr.mxu0 0.0
    %1060 = vmatpush1.msra.mxu0 0.0
    %1061 = vmatprep.subr.mxu0 0.0
    %1062 = vmatpush1.msra.mxu0 0.0
    %1063 = vmatprep.subr.mxu0 0.0
    %1064 = vmatpush1.msra.mxu0 0.0
    %1065 = vmatprep.subr.mxu0 0.0
    %1066 = vmatpush1.msra.mxu0 0.0
    %1067 = vmatprep.mubr.f32.mxu0 0.0
    %1068 = vmatmul.mubr.f32.gmra.mrb[0].mxu0 %v999
    %v1069 = vpop.f32.mrb[0].mxu0
    %v1070 = vadd.f32 %v922, %v1069
    %v1071 = vpop.f32.mrb[0].mxu0
    %1072 = vdwg.mxu0
    %v1074 = vsel %vm182, %v510, 0
    %1076 = vmatprep.subr.mxu0 0.0
    %1077 = vmatpush1.msra.mxu0 %v1001
    %1078 = vmatprep.subr.mxu0 0.0
    %1079 = vmatpush1.msra.mxu0 0.0
    %1080 = vmatprep.subr.mxu0 0.0
    %1081 = vmatpush1.msra.mxu0 0.0
    %1082 = vmatprep.subr.mxu0 0.0
    %1083 = vmatpush1.msra.mxu0 0.0
    %1084 = vmatprep.subr.mxu0 0.0
    %1085 = vmatpush1.msra.mxu0 0.0
    %1086 = vmatprep.subr.mxu0 0.0
    %1087 = vmatpush1.msra.mxu0 0.0
    %1088 = vmatprep.subr.mxu0 0.0
    %1089 = vmatpush1.msra.mxu0 0.0
    %1090 = vmatprep.subr.mxu0 0.0
    %1091 = vmatpush1.msra.mxu0 0.0
    %1092 = vmatprep.subr.mxu0 0.0
    %1093 = vmatpush1.msra.mxu0 0.0
    %1094 = vmatprep.subr.mxu0 0.0
    %1095 = vmatpush1.msra.mxu0 0.0
    %1096 = vmatprep.subr.mxu0 0.0
    %1097 = vmatpush1.msra.mxu0 0.0
    %1098 = vmatprep.subr.mxu0 0.0
    %1099 = vmatpush1.msra.mxu0 0.0
    %1100 = vmatprep.subr.mxu0 0.0
    %1101 = vmatpush1.msra.mxu0 0.0
    %1102 = vmatprep.subr.mxu0 0.0
    %1103 = vmatpush1.msra.mxu0 0.0
    %1104 = vmatprep.subr.mxu0 0.0
    %1105 = vmatpush1.msra.mxu0 0.0
    %1106 = vmatprep.subr.mxu0 0.0
    %1107 = vmatpush1.msra.mxu0 0.0
    %1108 = vmatprep.subr.mxu0 0.0
    %1109 = vmatpush1.msra.mxu0 0.0
    %1110 = vmatprep.subr.mxu0 0.0
    %1111 = vmatpush1.msra.mxu0 0.0
    %1112 = vmatprep.subr.mxu0 0.0
    %1113 = vmatpush1.msra.mxu0 0.0
    %1114 = vmatprep.subr.mxu0 0.0
    %1115 = vmatpush1.msra.mxu0 0.0
    %1116 = vmatprep.subr.mxu0 0.0
    %1117 = vmatpush1.msra.mxu0 0.0
    %1118 = vmatprep.subr.mxu0 0.0
    %1119 = vmatpush1.msra.mxu0 0.0
    %1120 = vmatprep.subr.mxu0 0.0
    %1121 = vmatpush1.msra.mxu0 0.0
    %1122 = vmatprep.subr.mxu0 0.0
    %1123 = vmatpush1.msra.mxu0 0.0
    %1124 = vmatprep.subr.mxu0 0.0
    %1125 = vmatpush1.msra.mxu0 0.0
    %1126 = vmatprep.subr.mxu0 0.0
    %1127 = vmatpush1.msra.mxu0 0.0
    %1128 = vmatprep.subr.mxu0 0.0
    %1129 = vmatpush1.msra.mxu0 0.0
    %1130 = vmatprep.subr.mxu0 0.0
    %1131 = vmatpush1.msra.mxu0 0.0
    %1132 = vmatprep.subr.mxu0 0.0
    %1133 = vmatpush1.msra.mxu0 0.0
    %1134 = vmatprep.subr.mxu0 0.0
    %1135 = vmatpush1.msra.mxu0 0.0
    %1136 = vmatprep.subr.mxu0 0.0
    %1137 = vmatpush1.msra.mxu0 0.0
    %1138 = vmatprep.subr.mxu0 0.0
    %1139 = vmatpush1.msra.mxu0 0.0
    %1140 = vmatprep.mubr.f32.mxu0 0.0
    %1141 = vmatmul.mubr.f32.gmra.mrb[0].mxu0 %v1074
    %v1142 = vpop.f32.mrb[0].mxu0
    %v1143 = vadd.f32 %v995, %v1142
    %v1144 = vpop.f32.mrb[0].mxu0
    %1145 = vdwg.mxu0
    %v1146 = vlaneseq
    %v1147 = vshrl.u32 %v1146, 7
    %v1148 = vsub.s32 0, %v1147
    %v1149 = vrot.slane %v27, %v1148
    %v1150 = vadd.f32 %v1070, %v1149
    %v1151 = vadd.f32 %v1143, %v1149
    %v1152 = vadd.f32 %v23, %v1150
    %v1153 = vadd.f32 %v24, %v1151
    %v1154 = vsel %vm336, %v1152, 0.0
    %1155 = vadd.xlane.f32.xlu0 %v1154
    %v1156 = vpop.xlane.xlu0 %1155
    %v1157 = vsel %vm336, %v1153, 0.0
    %1158 = vadd.xlane.f32.xlu0 %v1157
    %v1159 = vpop.xlane.xlu0 %1158
    %v1160 = vrcp.pop 4.0
    %v1161 = vmul.f32 %v1156, %v1160
    %v1162 = vmul.f32 %v1159, %v1160
    %v1163 = vsub.f32 %v1152, %v1161
    %v1164 = vsub.f32 %v1153, %v1162
    %v1165 = vmul.f32 %v1163, %v1163
    %v1166 = vmul.f32 %v1164, %v1164
    %v1167 = vsel %vm336, %v1165, 0.0
    %1168 = vadd.xlane.f32.xlu0 %v1167
    %v1169 = vpop.xlane.xlu0 %1168
    %v1170 = vsel %vm336, %v1166, 0.0
    %1171 = vadd.xlane.f32.xlu0 %v1170
    %v1172 = vpop.xlane.xlu0 %1171
    %v1173 = vmul.f32 %v1169, %v1160
    %v1174 = vmul.f32 %v1172, %v1160
    %v1175 = vlaneseq
    %v1176 = vshrl.u32 %v1175, 7
    %v1177 = vsub.s32 1, %v1176
    %v1178 = vrot.slane %v27, %v1177
    %v1179 = vmul.f32 %v1178, %v1163
    %v1180 = vmul.f32 %v1178, %v1164
    %v1181 = vadd.f32 %v1173, 1e-20
    %v1182 = vadd.f32 %v1174, 1e-20
    %v1183 = vrsqrt.pop %v1181
    %v1184 = vrsqrt.pop %v1182
    %v1185 = vmul.f32 %v1179, %v1183
    %v1186 = vmul.f32 %v1180, %v1184
    %v1187 = vlaneseq
    %v1188 = vshrl.u32 %v1187, 7
    %v1189 = vsub.s32 2, %v1188
    %v1190 = vrot.slane %v27, %v1189
    %v1191 = vadd.f32 %v1185, %v1190
    %v1192 = vadd.f32 %v1186, %v1190
    %1193 = vst.msk [vmem:[#allocation5] sm:$0xf] %vm336, %v1191
    %1194 = vst.msk [vmem:[#allocation5 + $0x4] sm:$0xf] %vm336, %v1192
    // Predicated region
    $region10: #{tpu_custom_call.1} parent=1 // pred_check
      _
    $region11: #{tpu_custom_call.1} parent=1 // pred_check_branch
      %1196 = sbr.rel (0) target = $region13
    $region12: #{tpu_custom_call.1} parent=1 // pred_region
      %s1198 = ssub.s32 128, 128
      %1199 = vsyncadd [#allocation4], %s1198
      %s1200 = sshll.u32 [#allocation5], 4
      %s1201 = int_to_ptr.vmem [resolvable:$true] %s1200
      %1206 = dma.vmem_to_hbm [thread:$0]  %s1201, 128, %s1, [#allocation4], 64, 64, 4
    $region13: #{tpu_custom_call.1} parent=1 // pred_fallthru
      _
    // Predicated region
    $region14: #{tpu_custom_call.1} parent=1 // pred_check
      _
    $region15: #{tpu_custom_call.1} parent=1 // pred_check_branch
      %1208 = sbr.rel (0) target = $region17
    $region16: #{tpu_custom_call.1} parent=1 // pred_region
      %1209 = dma.done [#allocation4], 128
    $region17: #{tpu_custom_call.1} parent=1 // pred_fallthru
      _
    %1210 = vsyncpa [#allocation3], 1
    %1211 = vsyncpa [#allocation4], 1

</llo_original>
